<compile_context>
chip_gen: v7x
topology: tpu7x:2x2x1
jax: 0.10.0
libtpu: 0.0.40
codegen_flags: <defaults>
</compile_context>

<pallas_src>
import functools

import numpy as np
import jax
import jax.numpy as jnp
from jax.experimental import pallas as pl
from jax.experimental.pallas import tpu as pltpu

EPS = 1e-5


# ------------------------------- kernel --------------------------------------

def _basic_block_kernel(x_ref, w1_ref, g1_ref, b1_ref, w2_ref, g2_ref, b2_ref,
                        avg_ref, out_ref, *, N, H, W, C):
    WC = W * C
    R = N * H  # rows of the 2-D lane-dense activation slab

    # Image-boundary row masks for 'same' padding along H, built once (hoisted)
    # and reused by both convs.
    #   up   tap (ky=0): output row h reads input row h-1 -> drop rows h == 0
    #   down tap (ky=2): output row h reads input row h+1 -> drop rows h == H-1
    row_ids = jax.lax.broadcasted_iota(jnp.int32, (R, WC), 0)
    keep_up = (row_ids % H) != 0
    keep_down = (row_ids % H) != (H - 1)

    def conv3x3_bn(act2d, w_ref, g_ref, b_ref):
        # act2d: (N*H, W*C) f32 activations in packed, lane-dense layout.
        # 3x3 conv = 3 MXU matmuls (one per kernel row ky) against banded
        # (WC, WC) bf16 weights; the +/-1 row shifts go through the XLU (roll)
        # with boundary rows masked to zero (the H 'same' padding).
        up = jnp.where(keep_up, pltpu.roll(act2d, 1, 0), 0.0)        # row h-1
        down = jnp.where(keep_down, pltpu.roll(act2d, R - 1, 0), 0.0)  # row h+1

        acc = jnp.dot(up.astype(jnp.bfloat16), w_ref[0],
                      preferred_element_type=jnp.float32)
        acc += jnp.dot(act2d.astype(jnp.bfloat16), w_ref[1],
                       preferred_element_type=jnp.float32)
        acc += jnp.dot(down.astype(jnp.bfloat16), w_ref[2],
                       preferred_element_type=jnp.float32)

        # BatchNorm2d forward, training-mode batch stats, biased variance.
        # One pass: stack the two row-reductions and do a single (2,WC)x(WC,WC)
        # f32 matmul against the channel-averaging matrix (carries 1/(N*H*W)),
        # then var = E[x^2] - mean^2.
        stats = jnp.concatenate(
            [jnp.sum(acc, axis=0, keepdims=True),
             jnp.sum(acc * acc, axis=0, keepdims=True)], axis=0)      # (2, WC)
        stats = jnp.dot(stats, avg_ref[...], preferred_element_type=jnp.float32)
        mean_l = stats[0:1, :]
        var_l = stats[1:2, :] - mean_l * mean_l
        scale_l = g_ref[...] * jax.lax.rsqrt(var_l + EPS)             # EUP rsqrt
        return (acc - mean_l) * scale_l + b_ref[...]

    x2d = x_ref[...].astype(jnp.float32).reshape(R, WC)
    h = jnp.maximum(conv3x3_bn(x2d, w1_ref, g1_ref, b1_ref), 0.0)
    y = conv3x3_bn(h, w2_ref, g2_ref, b2_ref) + x2d                   # residual
    y = jnp.maximum(y, 0.0)
    out_ref[...] = y.reshape(out_ref.shape).astype(out_ref.dtype)


# ------------------------------- wrapper --------------------------------------

def basic_block_forward(x_nhwc, params):
    """x_nhwc: (N, H, W, C) float32. params: dict from make_basic_block_params."""
    N, H, W, C = x_nhwc.shape
    WC = W * C
    # This kernel assumes a single lane-dense 128-wide W*C packing (and
    # stride=1 / no downsample); other shapes need a different packing width.
    assert WC == 128, f"kernel requires W*C == 128, got {WC}"
    x2d = x_nhwc.reshape(N, H, WC)  # contiguous reshape: free

    vmem = lambda: pl.BlockSpec(memory_space=pltpu.MemorySpace.VMEM)
    out = pl.pallas_call(
        functools.partial(_basic_block_kernel, N=N, H=H, W=W, C=C),
        out_shape=jax.ShapeDtypeStruct((N, H, WC), x_nhwc.dtype),
        in_specs=[vmem() for _ in range(8)],
        out_specs=vmem(),
    )(x2d, params["w1"], params["gamma1"], params["beta1"],
      params["w2"], params["gamma2"], params["beta2"], params["chan_avg"])
    return out.reshape(N, H, W, C)


# --------------------------- parameter packing --------------------------------

def _banded_conv_weights(w_oihw, W_sp):
    """PyTorch OIHW (Cout, Cin, 3, 3) -> (3, W*Cin, W*Cout) banded bf16 matrices.

    B[ky][wi*Cin+cin, w*Cout+cout] = w[cout, cin, ky, wi-w+1] for |wi-w| <= 1,
    folding the 3 kx taps, the Cin->Cout contraction and 'same' padding along W
    into one lane-dense (128x128 here) matmul per kernel row ky.
    """
    Cout, Cin = int(w_oihw.shape[0]), int(w_oihw.shape[1])
    taps = np.asarray(jnp.transpose(w_oihw, (2, 3, 1, 0)))  # (ky, kx, Cin, Cout)
    mats = np.zeros((3, W_sp * Cin, W_sp * Cout), np.float32)
    for ky in range(3):
        for w in range(W_sp):
            for kx in range(3):
                wi = w + kx - 1
                if 0 <= wi < W_sp:
                    mats[ky, wi * Cin:(wi + 1) * Cin,
                         w * Cout:(w + 1) * Cout] = taps[ky, kx]
    return jnp.asarray(mats).astype(jnp.bfloat16)   # bf16 MXU feed


def _channel_avg_matrix(W_sp, C, count):
    """(W*C, W*C) f32: (row_sums @ M)[l] = per-channel mean of channel l % C."""
    lanes = np.arange(W_sp * C)
    m = (lanes[:, None] % C == lanes[None, :] % C).astype(np.float32) / float(count)
    return jnp.asarray(m)


def make_basic_block_params(w1_oihw, g1, b1, w2_oihw, g2, b2, N, H, W):
    C = int(w1_oihw.shape[1])
    tile = lambda v: jnp.tile(jnp.asarray(v, jnp.float32).reshape(1, C), (1, W))
    return {
        "w1": _banded_conv_weights(w1_oihw, W),
        "w2": _banded_conv_weights(w2_oihw, W),
        "gamma1": tile(g1), "beta1": tile(b1),
        "gamma2": tile(g2), "beta2": tile(b2),
        # Kept f32 (tiny matmul) so BN batch statistics stay accurate.
        "chan_avg": _channel_avg_matrix(W, C, N * H * W),
    }


# ---------------- reference (pure JAX, independent code path) -----------------

def _ref_conv3x3(x, w_oihw, conv_dtype):
    w_hwio = jnp.transpose(w_oihw, (2, 3, 1, 0)).astype(conv_dtype)
    return jax.lax.conv_general_dilated(
        x.astype(conv_dtype), w_hwio, window_strides=(1, 1),
        padding=((1, 1), (1, 1)),
        dimension_numbers=("NHWC", "HWIO", "NHWC"),
        preferred_element_type=jnp.float32)


def _ref_bn(y, gamma, beta):
    mean = jnp.mean(y, axis=(0, 1, 2), keepdims=True)
    var = jnp.mean(jnp.square(y - mean), axis=(0, 1, 2), keepdims=True)
    return gamma * (y - mean) / jnp.sqrt(var + EPS) + beta


def basic_block_reference(x_nhwc, w1_oihw, g1, b1, w2_oihw, g2, b2,
                          conv_dtype=jnp.float32):
    h = jax.nn.relu(_ref_bn(_ref_conv3x3(x_nhwc, w1_oihw, conv_dtype), g1, b1))
    out = _ref_bn(_ref_conv3x3(h, w2_oihw, conv_dtype), g2, b2) + x_nhwc
    return jax.nn.relu(out)


# ---------------------------------- main --------------------------------------

if __name__ == "__main__":
    # BasicBlock(inplanes=8, planes=8, stride=1, downsample=None)
    # C=8, W=16  =>  W*C = 128: exactly one lane-dense vreg width.
    N, C, H, W = 2, 8, 16, 16
    key = jax.random.PRNGKey(0)
    kx, kw1, kw2, kg1, kb1, kg2, kb2 = jax.random.split(key, 7)

    # Input constructed directly in NHWC (equivalent PyTorch input is NCHW).
    x = jax.random.normal(kx, (N, H, W, C), jnp.float32)

    # Deterministic parameter init (PyTorch weight layout OIHW, bias=False).
    fan_in = C * 3 * 3
    w1_oihw = jax.random.normal(kw1, (C, C, 3, 3), jnp.float32) / jnp.sqrt(fan_in)
    w2_oihw = jax.random.normal(kw2, (C, C, 3, 3), jnp.float32) / jnp.sqrt(fan_in)
    gamma1 = 1.0 + 0.1 * jax.random.normal(kg1, (C,), jnp.float32)
    beta1 = 0.1 * jax.random.normal(kb1, (C,), jnp.float32)
    gamma2 = 1.0 + 0.1 * jax.random.normal(kg2, (C,), jnp.float32)
    beta2 = 0.1 * jax.random.normal(kb2, (C,), jnp.float32)

    params = make_basic_block_params(w1_oihw, gamma1, beta1,
                                     w2_oihw, gamma2, beta2, N, H, W)

    out = jax.jit(basic_block_forward)(x, params)
    out = jax.block_until_ready(out)
    assert out.shape == (N, H, W, C)

    # Structural check (banding / rolls+masks / BN / residual): reference with
    # bf16 conv inputs + f32 accumulation matches the kernel's MXU numerics.
    ref_b = basic_block_reference(x, w1_oihw, gamma1, beta1, w2_oihw, gamma2,
                                  beta2, conv_dtype=jnp.bfloat16)
    ref_b = jax.block_until_ready(ref_b)
    err_b = float(jnp.max(jnp.abs(out - ref_b)))
    assert err_b < 5e-3, f"mismatch vs bf16-matmul reference: {err_b}"

    # End-to-end check vs the pure-f32 module semantics (tolerance reflects the
    # deliberate bf16 quantization of the conv matmul inputs).
    ref_f = basic_block_reference(x, w1_oihw, gamma1, beta1, w2_oihw, gamma2,
                                  beta2, conv_dtype=jnp.float32)
    ref_f = jax.block_until_ready(ref_f)
    err_f = float(jnp.max(jnp.abs(out - ref_f)))
    assert err_f < 5e-2, f"mismatch vs f32 reference: {err_f}"

    print("KERNEL_OK")
</pallas_src>

<mosaic_0001>
module attributes {stable_mosaic.version = 11 : i64} {
  func.func @_basic_block_kernel(%arg0: memref<2x16x128xf32, #tpu.memory_space<vmem>>, %arg1: memref<3x128x128xbf16, #tpu.memory_space<vmem>>, %arg2: memref<1x128xf32, #tpu.memory_space<vmem>>, %arg3: memref<1x128xf32, #tpu.memory_space<vmem>>, %arg4: memref<3x128x128xbf16, #tpu.memory_space<vmem>>, %arg5: memref<1x128xf32, #tpu.memory_space<vmem>>, %arg6: memref<1x128xf32, #tpu.memory_space<vmem>>, %arg7: memref<128x128xf32, #tpu.memory_space<vmem>>, %arg8: memref<2x16x128xf32, #tpu.memory_space<vmem>>) attributes {dimension_semantics = [], scalar_prefetch = 0 : i64, scratch_operands = 0 : i64, tpu.core_type = #tpu.core_type<tc>} {
    %0 = tpu.iota {dimensions = array<i32: 0>} : vector<32x128xi32>
    %c16_i32 = arith.constant 16 : i32
    %c0_i32 = arith.constant 0 : i32
    %1 = arith.cmpi eq, %c16_i32, %c0_i32 : i32
    %c1_i32 = arith.constant 1 : i32
    %2 = arith.select %1, %c1_i32, %c16_i32 : i32
    %3 = vector.broadcast %2 : i32 to vector<32x128xi32>
    %4 = arith.remsi %0, %3 : vector<32x128xi32>
    %c0_i32_0 = arith.constant 0 : i32
    %5 = vector.broadcast %c0_i32_0 : i32 to vector<32x128xi32>
    %6 = arith.cmpi ne, %4, %5 : vector<32x128xi32>
    %c0_i32_1 = arith.constant 0 : i32
    %7 = vector.broadcast %c0_i32_1 : i32 to vector<32x128xi32>
    %8 = arith.cmpi slt, %4, %7 : vector<32x128xi32>
    %c0_i32_2 = arith.constant 0 : i32
    %9 = arith.cmpi slt, %2, %c0_i32_2 : i32
    %10 = vector.broadcast %9 : i1 to vector<32x128xi1>
    %11 = vector.broadcast %10 : vector<32x128xi1> to vector<32x128xi1>
    %12 = arith.xori %8, %11 : vector<32x128xi1>
    %13 = arith.andi %12, %6 : vector<32x128xi1>
    %14 = vector.broadcast %2 : i32 to vector<32x128xi32>
    %15 = arith.addi %4, %14 : vector<32x128xi32>
    %16 = arith.select %13, %15, %4 : vector<32x128xi1>, vector<32x128xi32>
    %c0_i32_3 = arith.constant 0 : i32
    %17 = vector.broadcast %c0_i32_3 : i32 to vector<32x128xi32>
    %18 = arith.cmpi ne, %16, %17 : vector<32x128xi32>
    %c16_i32_4 = arith.constant 16 : i32
    %c0_i32_5 = arith.constant 0 : i32
    %19 = arith.cmpi eq, %c16_i32_4, %c0_i32_5 : i32
    %c1_i32_6 = arith.constant 1 : i32
    %20 = arith.select %19, %c1_i32_6, %c16_i32_4 : i32
    %21 = vector.broadcast %20 : i32 to vector<32x128xi32>
    %22 = arith.remsi %0, %21 : vector<32x128xi32>
    %c0_i32_7 = arith.constant 0 : i32
    %23 = vector.broadcast %c0_i32_7 : i32 to vector<32x128xi32>
    %24 = arith.cmpi ne, %22, %23 : vector<32x128xi32>
    %c0_i32_8 = arith.constant 0 : i32
    %25 = vector.broadcast %c0_i32_8 : i32 to vector<32x128xi32>
    %26 = arith.cmpi slt, %22, %25 : vector<32x128xi32>
    %c0_i32_9 = arith.constant 0 : i32
    %27 = arith.cmpi slt, %20, %c0_i32_9 : i32
    %28 = vector.broadcast %27 : i1 to vector<32x128xi1>
    %29 = vector.broadcast %28 : vector<32x128xi1> to vector<32x128xi1>
    %30 = arith.xori %26, %29 : vector<32x128xi1>
    %31 = arith.andi %30, %24 : vector<32x128xi1>
    %32 = vector.broadcast %20 : i32 to vector<32x128xi32>
    %33 = arith.addi %22, %32 : vector<32x128xi32>
    %34 = arith.select %31, %33, %22 : vector<32x128xi1>, vector<32x128xi32>
    %c15_i32 = arith.constant 15 : i32
    %35 = vector.broadcast %c15_i32 : i32 to vector<32x128xi32>
    %36 = arith.cmpi ne, %34, %35 : vector<32x128xi32>
    %c0 = arith.constant 0 : index
    %c0_10 = arith.constant 0 : index
    %c0_11 = arith.constant 0 : index
    %37 = vector.load %arg0[%c0, %c0_10, %c0_11] : memref<2x16x128xf32, #tpu.memory_space<vmem>>, vector<2x16x128xf32>
    %38 = vector.shape_cast %37 : vector<2x16x128xf32> to vector<32x128xf32>
    %c1_i32_12 = arith.constant 1 : i32
    %39 = tpu.dynamic_rotate %38 by %c1_i32_12 dim 0 : vector<32x128xf32>, i32 -> vector<32x128xf32>
    %cst = arith.constant 0.000000e+00 : f32
    %40 = vector.broadcast %cst : f32 to vector<32x128xf32>
    %41 = arith.select %18, %39, %40 : vector<32x128xi1>, vector<32x128xf32>
    %c31_i32 = arith.constant 31 : i32
    %42 = tpu.dynamic_rotate %38 by %c31_i32 dim 0 : vector<32x128xf32>, i32 -> vector<32x128xf32>
    %cst_13 = arith.constant 0.000000e+00 : f32
    %43 = vector.broadcast %cst_13 : f32 to vector<32x128xf32>
    %44 = arith.select %36, %42, %43 : vector<32x128xi1>, vector<32x128xf32>
    %45 = arith.truncf %41 : vector<32x128xf32> to vector<32x128xbf16>
    %c0_14 = arith.constant 0 : index
    %c0_15 = arith.constant 0 : index
    %c0_16 = arith.constant 0 : index
    %46 = vector.load %arg1[%c0_14, %c0_15, %c0_16] : memref<3x128x128xbf16, #tpu.memory_space<vmem>>, vector<1x128x128xbf16>
    %47 = vector.shape_cast %46 : vector<1x128x128xbf16> to vector<128x128xbf16>
    %cst_17 = arith.constant dense<0.000000e+00> : vector<32x128xf32>
    %48 = tpu.matmul %45, %47, %cst_17 {dimension_numbers = #tpu.dot_dimension_numbers<[1], [0], [0], [1], [0, 0, 1, 1], [], []>} : vector<32x128xbf16>, vector<128x128xbf16>, vector<32x128xf32> -> vector<32x128xf32>
    %49 = arith.truncf %38 : vector<32x128xf32> to vector<32x128xbf16>
    %c1 = arith.constant 1 : index
    %c0_18 = arith.constant 0 : index
    %c0_19 = arith.constant 0 : index
    %50 = vector.load %arg1[%c1, %c0_18, %c0_19] : memref<3x128x128xbf16, #tpu.memory_space<vmem>>, vector<1x128x128xbf16>
    %51 = vector.shape_cast %50 : vector<1x128x128xbf16> to vector<128x128xbf16>
    %cst_20 = arith.constant dense<0.000000e+00> : vector<32x128xf32>
    %52 = tpu.matmul %49, %51, %cst_20 {dimension_numbers = #tpu.dot_dimension_numbers<[1], [0], [0], [1], [0, 0, 1, 1], [], []>} : vector<32x128xbf16>, vector<128x128xbf16>, vector<32x128xf32> -> vector<32x128xf32>
    %53 = arith.addf %48, %52 : vector<32x128xf32>
    %54 = arith.truncf %44 : vector<32x128xf32> to vector<32x128xbf16>
    %c2 = arith.constant 2 : index
    %c0_21 = arith.constant 0 : index
    %c0_22 = arith.constant 0 : index
    %55 = vector.load %arg1[%c2, %c0_21, %c0_22] : memref<3x128x128xbf16, #tpu.memory_space<vmem>>, vector<1x128x128xbf16>
    %56 = vector.shape_cast %55 : vector<1x128x128xbf16> to vector<128x128xbf16>
    %cst_23 = arith.constant dense<0.000000e+00> : vector<32x128xf32>
    %57 = tpu.matmul %54, %56, %cst_23 {dimension_numbers = #tpu.dot_dimension_numbers<[1], [0], [0], [1], [0, 0, 1, 1], [], []>} : vector<32x128xbf16>, vector<128x128xbf16>, vector<32x128xf32> -> vector<32x128xf32>
    %58 = arith.addf %53, %57 : vector<32x128xf32>
    %cst_24 = arith.constant dense<0.000000e+00> : vector<128xf32>
    %59 = vector.multi_reduction <add>, %58, %cst_24 [0] : vector<32x128xf32> to vector<128xf32>
    %60 = vector.shape_cast %59 : vector<128xf32> to vector<1x128xf32>
    %61 = arith.mulf %58, %58 : vector<32x128xf32>
    %cst_25 = arith.constant dense<0.000000e+00> : vector<128xf32>
    %62 = vector.multi_reduction <add>, %61, %cst_25 [0] : vector<32x128xf32> to vector<128xf32>
    %63 = vector.shape_cast %62 : vector<128xf32> to vector<1x128xf32>
    %64 = tpu.concatenate %60, %63 in 0 : vector<1x128xf32>, vector<1x128xf32> -> vector<2x128xf32>
    %c0_26 = arith.constant 0 : index
    %c0_27 = arith.constant 0 : index
    %65 = vector.load %arg7[%c0_26, %c0_27] : memref<128x128xf32, #tpu.memory_space<vmem>>, vector<128x128xf32>
    %cst_28 = arith.constant dense<0.000000e+00> : vector<2x128xf32>
    %66 = tpu.matmul %64, %65, %cst_28 {dimension_numbers = #tpu.dot_dimension_numbers<[1], [0], [0], [1], [0, 0, 1, 1], [], []>} : vector<2x128xf32>, vector<128x128xf32>, vector<2x128xf32> -> vector<2x128xf32>
    %67 = vector.extract_strided_slice %66 {offsets = [0, 0], sizes = [1, 128], strides = [1, 1]} : vector<2x128xf32> to vector<1x128xf32>
    %68 = vector.extract_strided_slice %66 {offsets = [1, 0], sizes = [1, 128], strides = [1, 1]} : vector<2x128xf32> to vector<1x128xf32>
    %69 = arith.mulf %67, %67 : vector<1x128xf32>
    %70 = arith.subf %68, %69 : vector<1x128xf32>
    %c0_29 = arith.constant 0 : index
    %c0_30 = arith.constant 0 : index
    %71 = vector.load %arg2[%c0_29, %c0_30] : memref<1x128xf32, #tpu.memory_space<vmem>>, vector<1x128xf32>
    %cst_31 = arith.constant 9.99999974E-6 : f32
    %72 = vector.broadcast %cst_31 : f32 to vector<1x128xf32>
    %73 = arith.addf %70, %72 : vector<1x128xf32>
    %74 = math.rsqrt %73 : vector<1x128xf32>
    %75 = arith.mulf %71, %74 : vector<1x128xf32>
    %76 = vector.broadcast %67 : vector<1x128xf32> to vector<32x128xf32>
    %77 = arith.subf %58, %76 : vector<32x128xf32>
    %78 = vector.broadcast %75 : vector<1x128xf32> to vector<32x128xf32>
    %79 = arith.mulf %77, %78 : vector<32x128xf32>
    %c0_32 = arith.constant 0 : index
    %c0_33 = arith.constant 0 : index
    %80 = vector.load %arg3[%c0_32, %c0_33] : memref<1x128xf32, #tpu.memory_space<vmem>>, vector<1x128xf32>
    %81 = vector.broadcast %80 : vector<1x128xf32> to vector<32x128xf32>
    %82 = arith.addf %79, %81 : vector<32x128xf32>
    %cst_34 = arith.constant 0.000000e+00 : f32
    %83 = vector.broadcast %cst_34 : f32 to vector<32x128xf32>
    %84 = arith.maximumf %82, %83 : vector<32x128xf32>
    %c1_i32_35 = arith.constant 1 : i32
    %85 = tpu.dynamic_rotate %84 by %c1_i32_35 dim 0 : vector<32x128xf32>, i32 -> vector<32x128xf32>
    %cst_36 = arith.constant 0.000000e+00 : f32
    %86 = vector.broadcast %cst_36 : f32 to vector<32x128xf32>
    %87 = arith.select %18, %85, %86 : vector<32x128xi1>, vector<32x128xf32>
    %c31_i32_37 = arith.constant 31 : i32
    %88 = tpu.dynamic_rotate %84 by %c31_i32_37 dim 0 : vector<32x128xf32>, i32 -> vector<32x128xf32>
    %cst_38 = arith.constant 0.000000e+00 : f32
    %89 = vector.broadcast %cst_38 : f32 to vector<32x128xf32>
    %90 = arith.select %36, %88, %89 : vector<32x128xi1>, vector<32x128xf32>
    %91 = arith.truncf %87 : vector<32x128xf32> to vector<32x128xbf16>
    %c0_39 = arith.constant 0 : index
    %c0_40 = arith.constant 0 : index
    %c0_41 = arith.constant 0 : index
    %92 = vector.load %arg4[%c0_39, %c0_40, %c0_41] : memref<3x128x128xbf16, #tpu.memory_space<vmem>>, vector<1x128x128xbf16>
    %93 = vector.shape_cast %92 : vector<1x128x128xbf16> to vector<128x128xbf16>
    %cst_42 = arith.constant dense<0.000000e+00> : vector<32x128xf32>
    %94 = tpu.matmul %91, %93, %cst_42 {dimension_numbers = #tpu.dot_dimension_numbers<[1], [0], [0], [1], [0, 0, 1, 1], [], []>} : vector<32x128xbf16>, vector<128x128xbf16>, vector<32x128xf32> -> vector<32x128xf32>
    %95 = arith.truncf %84 : vector<32x128xf32> to vector<32x128xbf16>
    %c1_43 = arith.constant 1 : index
    %c0_44 = arith.constant 0 : index
    %c0_45 = arith.constant 0 : index
    %96 = vector.load %arg4[%c1_43, %c0_44, %c0_45] : memref<3x128x128xbf16, #tpu.memory_space<vmem>>, vector<1x128x128xbf16>
    %97 = vector.shape_cast %96 : vector<1x128x128xbf16> to vector<128x128xbf16>
    %cst_46 = arith.constant dense<0.000000e+00> : vector<32x128xf32>
    %98 = tpu.matmul %95, %97, %cst_46 {dimension_numbers = #tpu.dot_dimension_numbers<[1], [0], [0], [1], [0, 0, 1, 1], [], []>} : vector<32x128xbf16>, vector<128x128xbf16>, vector<32x128xf32> -> vector<32x128xf32>
    %99 = arith.addf %94, %98 : vector<32x128xf32>
    %100 = arith.truncf %90 : vector<32x128xf32> to vector<32x128xbf16>
    %c2_47 = arith.constant 2 : index
    %c0_48 = arith.constant 0 : index
    %c0_49 = arith.constant 0 : index
    %101 = vector.load %arg4[%c2_47, %c0_48, %c0_49] : memref<3x128x128xbf16, #tpu.memory_space<vmem>>, vector<1x128x128xbf16>
    %102 = vector.shape_cast %101 : vector<1x128x128xbf16> to vector<128x128xbf16>
    %cst_50 = arith.constant dense<0.000000e+00> : vector<32x128xf32>
    %103 = tpu.matmul %100, %102, %cst_50 {dimension_numbers = #tpu.dot_dimension_numbers<[1], [0], [0], [1], [0, 0, 1, 1], [], []>} : vector<32x128xbf16>, vector<128x128xbf16>, vector<32x128xf32> -> vector<32x128xf32>
    %104 = arith.addf %99, %103 : vector<32x128xf32>
    %cst_51 = arith.constant dense<0.000000e+00> : vector<128xf32>
    %105 = vector.multi_reduction <add>, %104, %cst_51 [0] : vector<32x128xf32> to vector<128xf32>
    %106 = vector.shape_cast %105 : vector<128xf32> to vector<1x128xf32>
    %107 = arith.mulf %104, %104 : vector<32x128xf32>
    %cst_52 = arith.constant dense<0.000000e+00> : vector<128xf32>
    %108 = vector.multi_reduction <add>, %107, %cst_52 [0] : vector<32x128xf32> to vector<128xf32>
    %109 = vector.shape_cast %108 : vector<128xf32> to vector<1x128xf32>
    %110 = tpu.concatenate %106, %109 in 0 : vector<1x128xf32>, vector<1x128xf32> -> vector<2x128xf32>
    %c0_53 = arith.constant 0 : index
    %c0_54 = arith.constant 0 : index
    %111 = vector.load %arg7[%c0_53, %c0_54] : memref<128x128xf32, #tpu.memory_space<vmem>>, vector<128x128xf32>
    %cst_55 = arith.constant dense<0.000000e+00> : vector<2x128xf32>
    %112 = tpu.matmul %110, %111, %cst_55 {dimension_numbers = #tpu.dot_dimension_numbers<[1], [0], [0], [1], [0, 0, 1, 1], [], []>} : vector<2x128xf32>, vector<128x128xf32>, vector<2x128xf32> -> vector<2x128xf32>
    %113 = vector.extract_strided_slice %112 {offsets = [0, 0], sizes = [1, 128], strides = [1, 1]} : vector<2x128xf32> to vector<1x128xf32>
    %114 = vector.extract_strided_slice %112 {offsets = [1, 0], sizes = [1, 128], strides = [1, 1]} : vector<2x128xf32> to vector<1x128xf32>
    %115 = arith.mulf %113, %113 : vector<1x128xf32>
    %116 = arith.subf %114, %115 : vector<1x128xf32>
    %c0_56 = arith.constant 0 : index
    %c0_57 = arith.constant 0 : index
    %117 = vector.load %arg5[%c0_56, %c0_57] : memref<1x128xf32, #tpu.memory_space<vmem>>, vector<1x128xf32>
    %cst_58 = arith.constant 9.99999974E-6 : f32
    %118 = vector.broadcast %cst_58 : f32 to vector<1x128xf32>
    %119 = arith.addf %116, %118 : vector<1x128xf32>
    %120 = math.rsqrt %119 : vector<1x128xf32>
    %121 = arith.mulf %117, %120 : vector<1x128xf32>
    %122 = vector.broadcast %113 : vector<1x128xf32> to vector<32x128xf32>
    %123 = arith.subf %104, %122 : vector<32x128xf32>
    %124 = vector.broadcast %121 : vector<1x128xf32> to vector<32x128xf32>
    %125 = arith.mulf %123, %124 : vector<32x128xf32>
    %c0_59 = arith.constant 0 : index
    %c0_60 = arith.constant 0 : index
    %126 = vector.load %arg6[%c0_59, %c0_60] : memref<1x128xf32, #tpu.memory_space<vmem>>, vector<1x128xf32>
    %127 = vector.broadcast %126 : vector<1x128xf32> to vector<32x128xf32>
    %128 = arith.addf %125, %127 : vector<32x128xf32>
    %129 = arith.addf %128, %38 : vector<32x128xf32>
    %cst_61 = arith.constant 0.000000e+00 : f32
    %130 = vector.broadcast %cst_61 : f32 to vector<32x128xf32>
    %131 = arith.maximumf %129, %130 : vector<32x128xf32>
    %132 = vector.shape_cast %131 : vector<32x128xf32> to vector<2x16x128xf32>
    %c0_62 = arith.constant 0 : index
    %c0_63 = arith.constant 0 : index
    %c0_64 = arith.constant 0 : index
    %133 = vector.load %arg8[%c0_62, %c0_63, %c0_64] : memref<2x16x128xf32, #tpu.memory_space<vmem>>, vector<2x16x128xf32>
    tpu.vector_store %arg8[%c0_62, %c0_63, %c0_64], %132 {strides = array<i32>} : memref<2x16x128xf32, #tpu.memory_space<vmem>>, vector<2x16x128xf32>,
    return
  }
}

</mosaic_0001>

<llo_original>
// kernel: basic_block_forward.1
$region0: #{basic_block_forward.1}
  #allocation0 [shape = 'u32[]', space=smem, size = 0x4, offset = 0x4, fixed_abs, tag = 'smem constant byte address 0x4 - core index']
  #allocation1 [shape = 'u32[144,128]{1,0:T(1,128)}', space=vmem, size = 0x12000, scoped, tag = 'internal scratch']
  %s0 = inlined_call_operand.vmem [shape: f32[2,16,128], index: 0, kind: input, shape index: {}]
  %s1 = inlined_call_operand.vmem [shape: bf16[3,128,128], index: 1, kind: input, shape index: {}]
  %s2 = inlined_call_operand.vmem [shape: f32[1,128], index: 2, kind: input, shape index: {}]
  %s3 = inlined_call_operand.vmem [shape: f32[1,128], index: 3, kind: input, shape index: {}]
  %s4 = inlined_call_operand.vmem [shape: bf16[3,128,128], index: 4, kind: input, shape index: {}]
  %s5 = inlined_call_operand.vmem [shape: f32[1,128], index: 5, kind: input, shape index: {}]
  %s6 = inlined_call_operand.vmem [shape: f32[1,128], index: 6, kind: input, shape index: {}]
  %s7 = inlined_call_operand.vmem [shape: f32[128,128], index: 7, kind: input, shape index: {}]
  %s8 = inlined_call_operand.vmem [shape: f32[2,16,128], index: 8, kind: output, shape index: {}]
  %s9 = sld [smem:[#allocation0]]
  $region42: #{basic_block_forward.1} parent=0
    _
  %s11 = ssub.s32 1, %s9
  %s12 = scalar_select 0, %s11, %s9
  // Predicated region
  $region2: #{basic_block_forward.1} parent=0 // pred_check
    _
  $region3: #{basic_block_forward.1} parent=0 // pred_check_branch
    %14 = sbr.rel (0) target = $region5
  $region4: #{basic_block_forward.1} parent=0 // pred_region
    _
  $region5: #{basic_block_forward.1} parent=0 // pred_fallthru
    _
  // Predicated region
  $region6: #{basic_block_forward.1} parent=0 // pred_check
    _
  $region7: #{basic_block_forward.1} parent=0 // pred_check_branch
    %16 = sbr.rel (0) target = $region9
  $region8: #{basic_block_forward.1} parent=0 // pred_region
    _
  $region9: #{basic_block_forward.1} parent=0 // pred_fallthru
    _
  // Predicated region
  $region10: #{basic_block_forward.1} parent=0 // pred_check
    _
  $region11: #{basic_block_forward.1} parent=0 // pred_check_branch
    %18 = sbr.rel (0) target = $region13
  $region12: #{basic_block_forward.1} parent=0 // pred_region
    _
  $region13: #{basic_block_forward.1} parent=0 // pred_fallthru
    _
  // Predicated region
  $region14: #{basic_block_forward.1} parent=0 // pred_check
    _
  $region15: #{basic_block_forward.1} parent=0 // pred_check_branch
    %20 = sbr.rel (0) target = $region17
  $region16: #{basic_block_forward.1} parent=0 // pred_region
    _
  $region17: #{basic_block_forward.1} parent=0 // pred_fallthru
    _
  // Predicated region
  $region18: #{basic_block_forward.1} parent=0 // pred_check
    _
  $region19: #{basic_block_forward.1} parent=0 // pred_check_branch
    %22 = sbr.rel (0) target = $region21
  $region20: #{basic_block_forward.1} parent=0 // pred_region
    _
  $region21: #{basic_block_forward.1} parent=0 // pred_fallthru
    _
  // Predicated region
  $region22: #{basic_block_forward.1} parent=0 // pred_check
    _
  $region23: #{basic_block_forward.1} parent=0 // pred_check_branch
    %24 = sbr.rel (0) target = $region25
  $region24: #{basic_block_forward.1} parent=0 // pred_region
    _
  $region25: #{basic_block_forward.1} parent=0 // pred_fallthru
    _
  // Predicated region
  $region26: #{basic_block_forward.1} parent=0 // pred_check
    _
  $region27: #{basic_block_forward.1} parent=0 // pred_check_branch
    %26 = sbr.rel (0) target = $region29
  $region28: #{basic_block_forward.1} parent=0 // pred_region
    _
  $region29: #{basic_block_forward.1} parent=0 // pred_fallthru
    _
  // Predicated region
  $region30: #{basic_block_forward.1} parent=0 // pred_check
    _
  $region31: #{basic_block_forward.1} parent=0 // pred_check_branch
    %28 = sbr.rel (0) target = $region33
  $region32: #{basic_block_forward.1} parent=0 // pred_region
    _
  $region33: #{basic_block_forward.1} parent=0 // pred_fallthru
    _
  %v30 = vlaneseq
  %v31 = vshrl.u32 %v30, 7
  %v32 = vadd.s32 %v31, 8
  %v33 = vadd.s32 %v31, 16
  %v34 = vadd.s32 %v31, 24
  %vm35 = vcmp.lt.s32.totalorder %v31, 0
  %v36 = vsub.s32 0, %v31
  %v37 = vsel %vm35, %v36, %v31
  %v38 = vshrl.u32 %v37, 4
  %v39 = vand.u32 %v37, 15
  %v40 = vsub.s32 0, %v39
  %v41 = vsel %vm35, %v40, %v39
  %vm42 = vcmp.lt.s32.totalorder %v32, 0
  %v43 = vsub.s32 0, %v32
  %v44 = vsel %vm42, %v43, %v32
  %v45 = vshrl.u32 %v44, 4
  %v46 = vand.u32 %v44, 15
  %v47 = vsub.s32 0, %v46
  %v48 = vsel %vm42, %v47, %v46
  %vm49 = vcmp.lt.s32.totalorder %v33, 0
  %v50 = vsub.s32 0, %v33
  %v51 = vsel %vm49, %v50, %v33
  %v52 = vshrl.u32 %v51, 4
  %v53 = vand.u32 %v51, 15
  %v54 = vsub.s32 0, %v53
  %v55 = vsel %vm49, %v54, %v53
  %vm56 = vcmp.lt.s32.totalorder %v34, 0
  %v57 = vsub.s32 0, %v34
  %v58 = vsel %vm56, %v57, %v34
  %v59 = vshrl.u32 %v58, 4
  %v60 = vand.u32 %v58, 15
  %v61 = vsub.s32 0, %v60
  %v62 = vsel %vm56, %v61, %v60
  %vm63 = vcmp.ne.s32.totalorder %v41, 0
  %vm64 = vcmp.ne.s32.totalorder %v48, 0
  %vm65 = vcmp.ne.s32.totalorder %v55, 0
  %vm66 = vcmp.ne.s32.totalorder %v62, 0
  %vm67 = vcmp.lt.s32.totalorder %v41, 0
  %vm68 = vcmp.lt.s32.totalorder %v48, 0
  %vm69 = vcmp.lt.s32.totalorder %v55, 0
  %vm70 = vcmp.lt.s32.totalorder %v62, 0
  %vm71 = vmand %vm67, %vm63
  %vm72 = vmand %vm68, %vm64
  %vm73 = vmand %vm69, %vm65
  %vm74 = vmand %vm70, %vm66
  %v75 = vadd.s32 %v41, 16
  %v76 = vadd.s32 %v48, 16
  %v77 = vadd.s32 %v55, 16
  %v78 = vadd.s32 %v62, 16
  %v79 = vsel %vm71, %v75, %v41
  %v80 = vsel %vm72, %v76, %v48
  %v81 = vsel %vm73, %v77, %v55
  %v82 = vsel %vm74, %v78, %v62
  %vm83 = vcmp.ne.s32.totalorder %v79, 0
  %vm84 = vcmp.ne.s32.totalorder %v80, 0
  %vm85 = vcmp.ne.s32.totalorder %v81, 0
  %vm86 = vcmp.ne.s32.totalorder %v82, 0
  %vm87 = vcmp.ne.s32.totalorder %v79, 15
  %vm88 = vcmp.ne.s32.totalorder %v80, 15
  %vm89 = vcmp.ne.s32.totalorder %v81, 15
  %vm90 = vcmp.ne.s32.totalorder %v82, 15
  %v91 = vld [vmem:[%s0] sm:$0xff]
  %v92 = vld [vmem:[%s0 + $0x8] sm:$0xff]
  %v93 = vld [vmem:[%s0 + $0x10] sm:$0xff]
  %v94 = vld [vmem:[%s0 + $0x18] sm:$0xff]
  %v95 = vrot.slane %v91, 7
  %v96 = vrot.slane %v92, 7
  %v97 = vrot.slane %v93, 7
  %v98 = vrot.slane %v94, 7
  %vm99 = vcmp.lt.s32.totalorder %v31, 1
  %v100 = vsel %vm99, %v97, %v98
  %v101 = vsel %vm99, %v96, %v97
  %v102 = vsel %vm99, %v95, %v96
  %v103 = vsel %vm99, %v98, %v95
  %v104 = vsel %vm83, %v103, 0.0
  %v105 = vsel %vm84, %v102, 0.0
  %v106 = vsel %vm85, %v101, 0.0
  %v107 = vsel %vm86, %v100, 0.0
  %v108 = vrot.slane %v91, 1
  %v109 = vrot.slane %v92, 1
  %v110 = vrot.slane %v93, 1
  %v111 = vrot.slane %v94, 1
  %vm112 = vcmp.lt.s32.totalorder %v31, 7
  %v113 = vsel %vm112, %v110, %v111
  %v114 = vsel %vm112, %v109, %v110
  %v115 = vsel %vm112, %v108, %v109
  %v116 = vsel %vm112, %v111, %v108
  %v117 = vsel %vm87, %v115, 0.0
  %v118 = vsel %vm88, %v114, 0.0
  %v119 = vsel %vm89, %v113, 0.0
  %v120 = vsel %vm90, %v116, 0.0
  %v121 = vpack.c.bf16 %v105, %v104
  %v122 = vpack.c.bf16 %v107, %v106
  %v123 = vld [vmem:[%s1] sm:$0xf]
  %v124 = vld [vmem:[%s1 + $0x4] sm:$0xf]
  %v125 = vld [vmem:[%s1 + $0x8] sm:$0xf]
  %v126 = vld [vmem:[%s1 + $0xc] sm:$0xf]
  %v127 = vld [vmem:[%s1 + $0x10] sm:$0xf]
  %v128 = vld [vmem:[%s1 + $0x14] sm:$0xf]
  %v129 = vld [vmem:[%s1 + $0x18] sm:$0xf]
  %v130 = vld [vmem:[%s1 + $0x1c] sm:$0xf]
  %v131 = vld [vmem:[%s1 + $0x20] sm:$0xf]
  %v132 = vld [vmem:[%s1 + $0x24] sm:$0xf]
  %v133 = vld [vmem:[%s1 + $0x28] sm:$0xf]
  %v134 = vld [vmem:[%s1 + $0x2c] sm:$0xf]
  %v135 = vld [vmem:[%s1 + $0x30] sm:$0xf]
  %v136 = vld [vmem:[%s1 + $0x34] sm:$0xf]
  %v137 = vld [vmem:[%s1 + $0x38] sm:$0xf]
  %v138 = vld [vmem:[%s1 + $0x3c] sm:$0xf]
  %v139 = vpack.c.bf16 %v92, %v91
  %v140 = vpack.c.bf16 %v94, %v93
  %s141 = scalar_lea.vmem %s1, 64
  %v142 = vld [vmem:[%s141] sm:$0xf]
  %v143 = vld [vmem:[%s141 + $0x4] sm:$0xf]
  %v144 = vld [vmem:[%s141 + $0x8] sm:$0xf]
  %v145 = vld [vmem:[%s141 + $0xc] sm:$0xf]
  %v146 = vld [vmem:[%s141 + $0x10] sm:$0xf]
  %v147 = vld [vmem:[%s141 + $0x14] sm:$0xf]
  %v148 = vld [vmem:[%s141 + $0x18] sm:$0xf]
  %v149 = vld [vmem:[%s141 + $0x1c] sm:$0xf]
  %v150 = vld [vmem:[%s141 + $0x20] sm:$0xf]
  %v151 = vld [vmem:[%s141 + $0x24] sm:$0xf]
  %v152 = vld [vmem:[%s141 + $0x28] sm:$0xf]
  %v153 = vld [vmem:[%s141 + $0x2c] sm:$0xf]
  %v154 = vld [vmem:[%s141 + $0x30] sm:$0xf]
  %v155 = vld [vmem:[%s141 + $0x34] sm:$0xf]
  %v156 = vld [vmem:[%s141 + $0x38] sm:$0xf]
  %v157 = vld [vmem:[%s141 + $0x3c] sm:$0xf]
  %v174 = vunpack.c.l.b16 %v142
  %v175 = vunpack.c.l.b16 %v143
  %v176 = vunpack.c.l.b16 %v144
  %v177 = vunpack.c.l.b16 %v145
  %v178 = vunpack.c.l.b16 %v146
  %v179 = vunpack.c.l.b16 %v147
  %v180 = vunpack.c.l.b16 %v148
  %v181 = vunpack.c.l.b16 %v149
  %v182 = vunpack.c.l.b16 %v150
  %v183 = vunpack.c.l.b16 %v151
  %v184 = vunpack.c.l.b16 %v152
  %v185 = vunpack.c.l.b16 %v153
  %v186 = vunpack.c.l.b16 %v154
  %v187 = vunpack.c.l.b16 %v155
  %v188 = vunpack.c.l.b16 %v156
  %v189 = vunpack.c.l.b16 %v157
  %v190 = vpack.c.b16 %v175, %v174
  %v191 = vpack.c.b16 %v177, %v176
  %v192 = vpack.c.b16 %v179, %v178
  %v193 = vpack.c.b16 %v181, %v180
  %v194 = vpack.c.b16 %v183, %v182
  %v195 = vpack.c.b16 %v185, %v184
  %v196 = vpack.c.b16 %v187, %v186
  %v197 = vpack.c.b16 %v189, %v188
  %206 = vmatprep.subr.bf16.mxu0 0
  %207 = vmatpush1.bf16.msra.mxu0 %v190
  %208 = vmatprep.subr.bf16.mxu0 0
  %209 = vmatpush1.bf16.msra.mxu0 %v191
  %210 = vmatprep.subr.bf16.mxu0 0
  %211 = vmatpush1.bf16.msra.mxu0 %v192
  %212 = vmatprep.subr.bf16.mxu0 0
  %213 = vmatpush1.bf16.msra.mxu0 %v193
  %214 = vmatprep.subr.bf16.mxu0 0
  %215 = vmatpush1.bf16.msra.mxu0 %v194
  %216 = vmatprep.subr.bf16.mxu0 0
  %217 = vmatpush1.bf16.msra.mxu0 %v195
  %218 = vmatprep.subr.bf16.mxu0 0
  %219 = vmatpush1.bf16.msra.mxu0 %v196
  %220 = vmatprep.subr.bf16.mxu0 0
  %221 = vmatpush1.bf16.msra.mxu0 %v197
  %222 = vmatprep.subr.bf16.mxu0 0
  %223 = vmatpush1.bf16.msra.mxu0 0
  %224 = vmatprep.subr.bf16.mxu0 0
  %225 = vmatpush1.bf16.msra.mxu0 0
  %226 = vmatprep.subr.bf16.mxu0 0
  %227 = vmatpush1.bf16.msra.mxu0 0
  %228 = vmatprep.subr.bf16.mxu0 0
  %229 = vmatpush1.bf16.msra.mxu0 0
  %230 = vmatprep.subr.bf16.mxu0 0
  %231 = vmatpush1.bf16.msra.mxu0 0
  %232 = vmatprep.subr.bf16.mxu0 0
  %233 = vmatpush1.bf16.msra.mxu0 0
  %234 = vmatprep.subr.bf16.mxu0 0
  %235 = vmatpush1.bf16.msra.mxu0 0
  %236 = vmatprep.subr.bf16.mxu0 0
  %237 = vmatpush1.bf16.msra.mxu0 0
  %238 = vmatprep.mubr.bf16.mxu0 0
  %239 = vmatmul.mubr.bf16.gmra.mrb[0].mxu0 %v139
  %v240 = vpop.f32.mrb[0].mxu0
  %v241 = vadd.f32 0.0, %v240
  %v242 = vpop.f32.mrb[0].mxu0
  %v243 = vpop.f32.mrb[0].mxu0
  %v244 = vadd.f32 0.0, %v243
  %v245 = vpop.f32.mrb[0].mxu0
  %246 = vmatprep.mubr.bf16.mxu0 0
  %247 = vmatmul.mubr.bf16.gmra.mrb[0].mxu0 %v140
  %v248 = vpop.f32.mrb[0].mxu0
  %v249 = vadd.f32 0.0, %v248
  %v250 = vpop.f32.mrb[0].mxu0
  %v251 = vpop.f32.mrb[0].mxu0
  %v252 = vadd.f32 0.0, %v251
  %v253 = vpop.f32.mrb[0].mxu0
  %254 = vdwg.mxu0
  %v271 = vunpack.c.l.b16 %v123
  %v272 = vunpack.c.l.b16 %v124
  %v273 = vunpack.c.l.b16 %v125
  %v274 = vunpack.c.l.b16 %v126
  %v275 = vunpack.c.l.b16 %v127
  %v276 = vunpack.c.l.b16 %v128
  %v277 = vunpack.c.l.b16 %v129
  %v278 = vunpack.c.l.b16 %v130
  %v279 = vunpack.c.l.b16 %v131
  %v280 = vunpack.c.l.b16 %v132
  %v281 = vunpack.c.l.b16 %v133
  %v282 = vunpack.c.l.b16 %v134
  %v283 = vunpack.c.l.b16 %v135
  %v284 = vunpack.c.l.b16 %v136
  %v285 = vunpack.c.l.b16 %v137
  %v286 = vunpack.c.l.b16 %v138
  %v287 = vpack.c.b16 %v272, %v271
  %v288 = vpack.c.b16 %v274, %v273
  %v289 = vpack.c.b16 %v276, %v275
  %v290 = vpack.c.b16 %v278, %v277
  %v291 = vpack.c.b16 %v280, %v279
  %v292 = vpack.c.b16 %v282, %v281
  %v293 = vpack.c.b16 %v284, %v283
  %v294 = vpack.c.b16 %v286, %v285
  %303 = vmatprep.subr.bf16.mxu0 0
  %304 = vmatpush1.bf16.msra.mxu0 %v287
  %305 = vmatprep.subr.bf16.mxu0 0
  %306 = vmatpush1.bf16.msra.mxu0 %v288
  %307 = vmatprep.subr.bf16.mxu0 0
  %308 = vmatpush1.bf16.msra.mxu0 %v289
  %309 = vmatprep.subr.bf16.mxu0 0
  %310 = vmatpush1.bf16.msra.mxu0 %v290
  %311 = vmatprep.subr.bf16.mxu0 0
  %312 = vmatpush1.bf16.msra.mxu0 %v291
  %313 = vmatprep.subr.bf16.mxu0 0
  %314 = vmatpush1.bf16.msra.mxu0 %v292
  %315 = vmatprep.subr.bf16.mxu0 0
  %316 = vmatpush1.bf16.msra.mxu0 %v293
  %317 = vmatprep.subr.bf16.mxu0 0
  %318 = vmatpush1.bf16.msra.mxu0 %v294
  %319 = vmatprep.subr.bf16.mxu0 0
  %320 = vmatpush1.bf16.msra.mxu0 0
  %321 = vmatprep.subr.bf16.mxu0 0
  %322 = vmatpush1.bf16.msra.mxu0 0
  %323 = vmatprep.subr.bf16.mxu0 0
  %324 = vmatpush1.bf16.msra.mxu0 0
  %325 = vmatprep.subr.bf16.mxu0 0
  %326 = vmatpush1.bf16.msra.mxu0 0
  %327 = vmatprep.subr.bf16.mxu0 0
  %328 = vmatpush1.bf16.msra.mxu0 0
  %329 = vmatprep.subr.bf16.mxu0 0
  %330 = vmatpush1.bf16.msra.mxu0 0
  %331 = vmatprep.subr.bf16.mxu0 0
  %332 = vmatpush1.bf16.msra.mxu0 0
  %333 = vmatprep.subr.bf16.mxu0 0
  %334 = vmatpush1.bf16.msra.mxu0 0
  %335 = vmatprep.mubr.bf16.mxu0 0
  %336 = vmatmul.mubr.bf16.gmra.mrb[0].mxu0 %v121
  %v337 = vpop.f32.mrb[0].mxu0
  %v338 = vadd.f32 %v241, %v337
  %v339 = vpop.f32.mrb[0].mxu0
  %v340 = vpop.f32.mrb[0].mxu0
  %v341 = vadd.f32 %v244, %v340
  %v342 = vpop.f32.mrb[0].mxu0
  %343 = vmatprep.mubr.bf16.mxu0 0
  %344 = vmatmul.mubr.bf16.gmra.mrb[0].mxu0 %v122
  %v345 = vpop.f32.mrb[0].mxu0
  %v346 = vadd.f32 %v249, %v345
  %v347 = vpop.f32.mrb[0].mxu0
  %v348 = vpop.f32.mrb[0].mxu0
  %v349 = vadd.f32 %v252, %v348
  %v350 = vpop.f32.mrb[0].mxu0
  %351 = vdwg.mxu0
  %v352 = vpack.c.bf16 %v118, %v117
  %v353 = vpack.c.bf16 %v120, %v119
  %s354 = scalar_lea.vmem %s1, 128
  %v355 = vld [vmem:[%s354] sm:$0xf]
  %v356 = vld [vmem:[%s354 + $0x4] sm:$0xf]
  %v357 = vld [vmem:[%s354 + $0x8] sm:$0xf]
  %v358 = vld [vmem:[%s354 + $0xc] sm:$0xf]
  %v359 = vld [vmem:[%s354 + $0x10] sm:$0xf]
  %v360 = vld [vmem:[%s354 + $0x14] sm:$0xf]
  %v361 = vld [vmem:[%s354 + $0x18] sm:$0xf]
  %v362 = vld [vmem:[%s354 + $0x1c] sm:$0xf]
  %v363 = vld [vmem:[%s354 + $0x20] sm:$0xf]
  %v364 = vld [vmem:[%s354 + $0x24] sm:$0xf]
  %v365 = vld [vmem:[%s354 + $0x28] sm:$0xf]
  %v366 = vld [vmem:[%s354 + $0x2c] sm:$0xf]
  %v367 = vld [vmem:[%s354 + $0x30] sm:$0xf]
  %v368 = vld [vmem:[%s354 + $0x34] sm:$0xf]
  %v369 = vld [vmem:[%s354 + $0x38] sm:$0xf]
  %v370 = vld [vmem:[%s354 + $0x3c] sm:$0xf]
  %v387 = vunpack.c.l.b16 %v355
  %v388 = vunpack.c.l.b16 %v356
  %v389 = vunpack.c.l.b16 %v357
  %v390 = vunpack.c.l.b16 %v358
  %v391 = vunpack.c.l.b16 %v359
  %v392 = vunpack.c.l.b16 %v360
  %v393 = vunpack.c.l.b16 %v361
  %v394 = vunpack.c.l.b16 %v362
  %v395 = vunpack.c.l.b16 %v363
  %v396 = vunpack.c.l.b16 %v364
  %v397 = vunpack.c.l.b16 %v365
  %v398 = vunpack.c.l.b16 %v366
  %v399 = vunpack.c.l.b16 %v367
  %v400 = vunpack.c.l.b16 %v368
  %v401 = vunpack.c.l.b16 %v369
  %v402 = vunpack.c.l.b16 %v370
  %v403 = vpack.c.b16 %v388, %v387
  %v404 = vpack.c.b16 %v390, %v389
  %v405 = vpack.c.b16 %v392, %v391
  %v406 = vpack.c.b16 %v394, %v393
  %v407 = vpack.c.b16 %v396, %v395
  %v408 = vpack.c.b16 %v398, %v397
  %v409 = vpack.c.b16 %v400, %v399
  %v410 = vpack.c.b16 %v402, %v401
  %419 = vmatprep.subr.bf16.mxu0 0
  %420 = vmatpush1.bf16.msra.mxu0 %v403
  %421 = vmatprep.subr.bf16.mxu0 0
  %422 = vmatpush1.bf16.msra.mxu0 %v404
  %423 = vmatprep.subr.bf16.mxu0 0
  %424 = vmatpush1.bf16.msra.mxu0 %v405
  %425 = vmatprep.subr.bf16.mxu0 0
  %426 = vmatpush1.bf16.msra.mxu0 %v406
  %427 = vmatprep.subr.bf16.mxu0 0
  %428 = vmatpush1.bf16.msra.mxu0 %v407
  %429 = vmatprep.subr.bf16.mxu0 0
  %430 = vmatpush1.bf16.msra.mxu0 %v408
  %431 = vmatprep.subr.bf16.mxu0 0
  %432 = vmatpush1.bf16.msra.mxu0 %v409
  %433 = vmatprep.subr.bf16.mxu0 0
  %434 = vmatpush1.bf16.msra.mxu0 %v410
  %435 = vmatprep.subr.bf16.mxu0 0
  %436 = vmatpush1.bf16.msra.mxu0 0
  %437 = vmatprep.subr.bf16.mxu0 0
  %438 = vmatpush1.bf16.msra.mxu0 0
  %439 = vmatprep.subr.bf16.mxu0 0
  %440 = vmatpush1.bf16.msra.mxu0 0
  %441 = vmatprep.subr.bf16.mxu0 0
  %442 = vmatpush1.bf16.msra.mxu0 0
  %443 = vmatprep.subr.bf16.mxu0 0
  %444 = vmatpush1.bf16.msra.mxu0 0
  %445 = vmatprep.subr.bf16.mxu0 0
  %446 = vmatpush1.bf16.msra.mxu0 0
  %447 = vmatprep.subr.bf16.mxu0 0
  %448 = vmatpush1.bf16.msra.mxu0 0
  %449 = vmatprep.subr.bf16.mxu0 0
  %450 = vmatpush1.bf16.msra.mxu0 0
  %451 = vmatprep.mubr.bf16.mxu0 0
  %452 = vmatmul.mubr.bf16.gmra.mrb[0].mxu0 %v352
  %v453 = vpop.f32.mrb[0].mxu0
  %v454 = vadd.f32 0.0, %v453
  %v455 = vpop.f32.mrb[0].mxu0
  %v456 = vpop.f32.mrb[0].mxu0
  %v457 = vadd.f32 0.0, %v456
  %v458 = vpop.f32.mrb[0].mxu0
  %459 = vmatprep.mubr.bf16.mxu0 0
  %460 = vmatmul.mubr.bf16.gmra.mrb[0].mxu0 %v353
  %v461 = vpop.f32.mrb[0].mxu0
  %v462 = vadd.f32 0.0, %v461
  %v463 = vpop.f32.mrb[0].mxu0
  %v464 = vpop.f32.mrb[0].mxu0
  %v465 = vadd.f32 0.0, %v464
  %v466 = vpop.f32.mrb[0].mxu0
  %467 = vdwg.mxu0
  %v468 = vadd.f32 %v338, %v454
  %v469 = vadd.f32 %v341, %v457
  %v470 = vadd.f32 %v346, %v462
  %v471 = vadd.f32 %v349, %v465
  %v472 = vadd.f32 %v468, %v469
  %v473 = vadd.f32 %v472, %v470
  %v474 = vadd.f32 %v473, %v471
  %v475 = vrot.slane %v474, 4
  %v476 = vadd.f32 %v474, %v475
  %v477 = vrot.slane %v476, 2
  %v478 = vadd.f32 %v476, %v477
  %v479 = vrot.slane %v478, 1
  %v480 = vadd.f32 %v478, %v479
  %v481 = vmul.f32 %v468, %v468
  %v482 = vmul.f32 %v469, %v469
  %v483 = vmul.f32 %v470, %v470
  %v484 = vmul.f32 %v471, %v471
  %v485 = vadd.f32 %v481, %v482
  %v486 = vadd.f32 %v485, %v483
  %v487 = vadd.f32 %v486, %v484
  %v488 = vrot.slane %v487, 4
  %v489 = vadd.f32 %v487, %v488
  %v490 = vrot.slane %v489, 2
  %v491 = vadd.f32 %v489, %v490
  %v492 = vrot.slane %v491, 1
  %v493 = vadd.f32 %v491, %v492
  %vm494 = vcmask 1040384
  %v495 = vsel %vm494, %v480, %v493
  %v496 = vld [vmem:[%s7] sm:$0xff]
  %v497 = vld [vmem:[%s7 + $0x8] sm:$0xff]
  %v498 = vld [vmem:[%s7 + $0x10] sm:$0xff]
  %v499 = vld [vmem:[%s7 + $0x18] sm:$0xff]
  %v500 = vld [vmem:[%s7 + $0x20] sm:$0xff]
  %v501 = vld [vmem:[%s7 + $0x28] sm:$0xff]
  %v502 = vld [vmem:[%s7 + $0x30] sm:$0xff]
  %v503 = vld [vmem:[%s7 + $0x38] sm:$0xff]
  %v504 = vld [vmem:[%s7 + $0x40] sm:$0xff]
  %v505 = vld [vmem:[%s7 + $0x48] sm:$0xff]
  %v506 = vld [vmem:[%s7 + $0x50] sm:$0xff]
  %v507 = vld [vmem:[%s7 + $0x58] sm:$0xff]
  %v508 = vld [vmem:[%s7 + $0x60] sm:$0xff]
  %v509 = vld [vmem:[%s7 + $0x68] sm:$0xff]
  %v510 = vld [vmem:[%s7 + $0x70] sm:$0xff]
  %v511 = vld [vmem:[%s7 + $0x78] sm:$0xff]
  %512 = vmatprep.subr.mxu0 0.0
  %513 = vmatpush1.msra.mxu0 %v496
  %514 = vmatprep.subr.mxu0 0.0
  %515 = vmatpush1.msra.mxu0 %v497
  %516 = vmatprep.subr.mxu0 0.0
  %517 = vmatpush1.msra.mxu0 %v498
  %518 = vmatprep.subr.mxu0 0.0
  %519 = vmatpush1.msra.mxu0 %v499
  %520 = vmatprep.subr.mxu0 0.0
  %521 = vmatpush1.msra.mxu0 %v500
  %522 = vmatprep.subr.mxu0 0.0
  %523 = vmatpush1.msra.mxu0 %v501
  %524 = vmatprep.subr.mxu0 0.0
  %525 = vmatpush1.msra.mxu0 %v502
  %526 = vmatprep.subr.mxu0 0.0
  %527 = vmatpush1.msra.mxu0 %v503
  %528 = vmatprep.subr.mxu0 0.0
  %529 = vmatpush1.msra.mxu0 %v504
  %530 = vmatprep.subr.mxu0 0.0
  %531 = vmatpush1.msra.mxu0 %v505
  %532 = vmatprep.subr.mxu0 0.0
  %533 = vmatpush1.msra.mxu0 %v506
  %534 = vmatprep.subr.mxu0 0.0
  %535 = vmatpush1.msra.mxu0 %v507
  %536 = vmatprep.subr.mxu0 0.0
  %537 = vmatpush1.msra.mxu0 %v508
  %538 = vmatprep.subr.mxu0 0.0
  %539 = vmatpush1.msra.mxu0 %v509
  %540 = vmatprep.subr.mxu0 0.0
  %541 = vmatpush1.msra.mxu0 %v510
  %542 = vmatprep.subr.mxu0 0.0
  %543 = vmatpush1.msra.mxu0 %v511
  %544 = vmatprep.subr.mxu0 0.0
  %545 = vmatpush1.msra.mxu0 0.0
  %546 = vmatprep.subr.mxu0 0.0
  %547 = vmatpush1.msra.mxu0 0.0
  %548 = vmatprep.subr.mxu0 0.0
  %549 = vmatpush1.msra.mxu0 0.0
  %550 = vmatprep.subr.mxu0 0.0
  %551 = vmatpush1.msra.mxu0 0.0
  %552 = vmatprep.subr.mxu0 0.0
  %553 = vmatpush1.msra.mxu0 0.0
  %554 = vmatprep.subr.mxu0 0.0
  %555 = vmatpush1.msra.mxu0 0.0
  %556 = vmatprep.subr.mxu0 0.0
  %557 = vmatpush1.msra.mxu0 0.0
  %558 = vmatprep.subr.mxu0 0.0
  %559 = vmatpush1.msra.mxu0 0.0
  %560 = vmatprep.subr.mxu0 0.0
  %561 = vmatpush1.msra.mxu0 0.0
  %562 = vmatprep.subr.mxu0 0.0
  %563 = vmatpush1.msra.mxu0 0.0
  %564 = vmatprep.subr.mxu0 0.0
  %565 = vmatpush1.msra.mxu0 0.0
  %566 = vmatprep.subr.mxu0 0.0
  %567 = vmatpush1.msra.mxu0 0.0
  %568 = vmatprep.subr.mxu0 0.0
  %569 = vmatpush1.msra.mxu0 0.0
  %570 = vmatprep.subr.mxu0 0.0
  %571 = vmatpush1.msra.mxu0 0.0
  %572 = vmatprep.subr.mxu0 0.0
  %573 = vmatpush1.msra.mxu0 0.0
  %574 = vmatprep.subr.mxu0 0.0
  %575 = vmatpush1.msra.mxu0 0.0
  %576 = vmatprep.mubr.f32.mxu0 0.0
  %577 = vmatmul.mubr.f32.gmra.mrb[0].mxu0 %v495
  %v578 = vpop.f32.mrb[0].mxu0
  %v579 = vadd.f32 0.0, %v578
  %v580 = vpop.f32.mrb[0].mxu0
  %581 = vdwg.mxu0
  %v582 = vmul.f32 %v579, %v579
  %v584 = vrot.slane %v582, 7
  %v586 = vsub.f32 %v579, %v584
  %v587 = vld [vmem:[%s2] sm:$0x1]
  %v588 = vadd.f32 %v586, 1e-05
  %v589 = vrsqrt.pop %v588
  %v592 = vunpack.c.l.s4 1966171168
  %v593 = vunpack.c.0.s8 %v592
  %v594 = vlaneseq
  %v595 = vshrl.u32 %v594, 7
  %v596 = vsub.s32 %v593, %v595
  %v597 = vrot.slane %v589, %v596
  %v598 = vcombine.high %v597, %v597
  %v600 = vunpack.c.l.s4 1966171168
  %v601 = vunpack.c.0.s8 %v600
  %v602 = vlaneseq
  %v603 = vshrl.u32 %v602, 7
  %v604 = vsub.s32 %v601, %v603
  %v605 = vrot.slane %v598, %v604
  %v607 = vmul.f32 %v587, %v605
  %v608 = vlaneseq
  %v609 = vshrl.u32 %v608, 7
  %v610 = vsub.s32 0, %v609
  %v611 = vrot.slane %v579, %v610
  %v612 = vsub.f32 %v468, %v611
  %v613 = vsub.f32 %v469, %v611
  %v614 = vsub.f32 %v470, %v611
  %v615 = vsub.f32 %v471, %v611
  %v617 = vlaneseq
  %v618 = vshrl.u32 %v617, 7
  %v619 = vsub.s32 0, %v618
  %v620 = vrot.slane %v607, %v619
  %v622 = vmul.f32 %v612, %v620
  %v623 = vmul.f32 %v613, %v620
  %v624 = vmul.f32 %v614, %v620
  %v625 = vmul.f32 %v615, %v620
  %v626 = vld [vmem:[%s3] sm:$0x1]
  %v628 = vlaneseq
  %v629 = vshrl.u32 %v628, 7
  %v630 = vsub.s32 0, %v629
  %v631 = vrot.slane %v626, %v630
  %v633 = vadd.f32 %v622, %v631
  %v634 = vadd.f32 %v623, %v631
  %v635 = vadd.f32 %v624, %v631
  %v636 = vadd.f32 %v625, %v631
  %v637 = vmax.f32 %v633, 0.0
  %v638 = vmax.f32 %v634, 0.0
  %v639 = vmax.f32 %v635, 0.0
  %v640 = vmax.f32 %v636, 0.0
  %v641 = vrot.slane %v637, 7
  %v642 = vrot.slane %v638, 7
  %v643 = vrot.slane %v639, 7
  %v644 = vrot.slane %v640, 7
  %v645 = vsel %vm99, %v643, %v644
  %v646 = vsel %vm99, %v642, %v643
  %v647 = vsel %vm99, %v641, %v642
  %v648 = vsel %vm99, %v644, %v641
  %v649 = vsel %vm83, %v648, 0.0
  %v650 = vsel %vm84, %v647, 0.0
  %v651 = vsel %vm85, %v646, 0.0
  %v652 = vsel %vm86, %v645, 0.0
  %v653 = vrot.slane %v637, 1
  %v654 = vrot.slane %v638, 1
  %v655 = vrot.slane %v639, 1
  %v656 = vrot.slane %v640, 1
  %v657 = vsel %vm112, %v655, %v656
  %v658 = vsel %vm112, %v654, %v655
  %v659 = vsel %vm112, %v653, %v654
  %v660 = vsel %vm112, %v656, %v653
  %v661 = vsel %vm87, %v659, 0.0
  %v662 = vsel %vm88, %v658, 0.0
  %v663 = vsel %vm89, %v657, 0.0
  %v664 = vsel %vm90, %v660, 0.0
  %v665 = vpack.c.bf16 %v650, %v649
  %v666 = vpack.c.bf16 %v652, %v651
  %v667 = vld [vmem:[%s4] sm:$0xf]
  %v668 = vld [vmem:[%s4 + $0x4] sm:$0xf]
  %v669 = vld [vmem:[%s4 + $0x8] sm:$0xf]
  %v670 = vld [vmem:[%s4 + $0xc] sm:$0xf]
  %v671 = vld [vmem:[%s4 + $0x10] sm:$0xf]
  %v672 = vld [vmem:[%s4 + $0x14] sm:$0xf]
  %v673 = vld [vmem:[%s4 + $0x18] sm:$0xf]
  %v674 = vld [vmem:[%s4 + $0x1c] sm:$0xf]
  %v675 = vld [vmem:[%s4 + $0x20] sm:$0xf]
  %v676 = vld [vmem:[%s4 + $0x24] sm:$0xf]
  %v677 = vld [vmem:[%s4 + $0x28] sm:$0xf]
  %v678 = vld [vmem:[%s4 + $0x2c] sm:$0xf]
  %v679 = vld [vmem:[%s4 + $0x30] sm:$0xf]
  %v680 = vld [vmem:[%s4 + $0x34] sm:$0xf]
  %v681 = vld [vmem:[%s4 + $0x38] sm:$0xf]
  %v682 = vld [vmem:[%s4 + $0x3c] sm:$0xf]
  %v683 = vpack.c.bf16 %v638, %v637
  %v684 = vpack.c.bf16 %v640, %v639
  %s685 = scalar_lea.vmem %s4, 64
  %v686 = vld [vmem:[%s685] sm:$0xf]
  %v687 = vld [vmem:[%s685 + $0x4] sm:$0xf]
  %v688 = vld [vmem:[%s685 + $0x8] sm:$0xf]
  %v689 = vld [vmem:[%s685 + $0xc] sm:$0xf]
  %v690 = vld [vmem:[%s685 + $0x10] sm:$0xf]
  %v691 = vld [vmem:[%s685 + $0x14] sm:$0xf]
  %v692 = vld [vmem:[%s685 + $0x18] sm:$0xf]
  %v693 = vld [vmem:[%s685 + $0x1c] sm:$0xf]
  %v694 = vld [vmem:[%s685 + $0x20] sm:$0xf]
  %v695 = vld [vmem:[%s685 + $0x24] sm:$0xf]
  %v696 = vld [vmem:[%s685 + $0x28] sm:$0xf]
  %v697 = vld [vmem:[%s685 + $0x2c] sm:$0xf]
  %v698 = vld [vmem:[%s685 + $0x30] sm:$0xf]
  %v699 = vld [vmem:[%s685 + $0x34] sm:$0xf]
  %v700 = vld [vmem:[%s685 + $0x38] sm:$0xf]
  %v701 = vld [vmem:[%s685 + $0x3c] sm:$0xf]
  %v718 = vunpack.c.l.b16 %v686
  %v719 = vunpack.c.l.b16 %v687
  %v720 = vunpack.c.l.b16 %v688
  %v721 = vunpack.c.l.b16 %v689
  %v722 = vunpack.c.l.b16 %v690
  %v723 = vunpack.c.l.b16 %v691
  %v724 = vunpack.c.l.b16 %v692
  %v725 = vunpack.c.l.b16 %v693
  %v726 = vunpack.c.l.b16 %v694
  %v727 = vunpack.c.l.b16 %v695
  %v728 = vunpack.c.l.b16 %v696
  %v729 = vunpack.c.l.b16 %v697
  %v730 = vunpack.c.l.b16 %v698
  %v731 = vunpack.c.l.b16 %v699
  %v732 = vunpack.c.l.b16 %v700
  %v733 = vunpack.c.l.b16 %v701
  %v734 = vpack.c.b16 %v719, %v718
  %v735 = vpack.c.b16 %v721, %v720
  %v736 = vpack.c.b16 %v723, %v722
  %v737 = vpack.c.b16 %v725, %v724
  %v738 = vpack.c.b16 %v727, %v726
  %v739 = vpack.c.b16 %v729, %v728
  %v740 = vpack.c.b16 %v731, %v730
  %v741 = vpack.c.b16 %v733, %v732
  %750 = vmatprep.subr.bf16.mxu0 0
  %751 = vmatpush1.bf16.msra.mxu0 %v734
  %752 = vmatprep.subr.bf16.mxu0 0
  %753 = vmatpush1.bf16.msra.mxu0 %v735
  %754 = vmatprep.subr.bf16.mxu0 0
  %755 = vmatpush1.bf16.msra.mxu0 %v736
  %756 = vmatprep.subr.bf16.mxu0 0
  %757 = vmatpush1.bf16.msra.mxu0 %v737
  %758 = vmatprep.subr.bf16.mxu0 0
  %759 = vmatpush1.bf16.msra.mxu0 %v738
  %760 = vmatprep.subr.bf16.mxu0 0
  %761 = vmatpush1.bf16.msra.mxu0 %v739
  %762 = vmatprep.subr.bf16.mxu0 0
  %763 = vmatpush1.bf16.msra.mxu0 %v740
  %764 = vmatprep.subr.bf16.mxu0 0
  %765 = vmatpush1.bf16.msra.mxu0 %v741
  %766 = vmatprep.subr.bf16.mxu0 0
  %767 = vmatpush1.bf16.msra.mxu0 0
  %768 = vmatprep.subr.bf16.mxu0 0
  %769 = vmatpush1.bf16.msra.mxu0 0
  %770 = vmatprep.subr.bf16.mxu0 0
  %771 = vmatpush1.bf16.msra.mxu0 0
  %772 = vmatprep.subr.bf16.mxu0 0
  %773 = vmatpush1.bf16.msra.mxu0 0
  %774 = vmatprep.subr.bf16.mxu0 0
  %775 = vmatpush1.bf16.msra.mxu0 0
  %776 = vmatprep.subr.bf16.mxu0 0
  %777 = vmatpush1.bf16.msra.mxu0 0
  %778 = vmatprep.subr.bf16.mxu0 0
  %779 = vmatpush1.bf16.msra.mxu0 0
  %780 = vmatprep.subr.bf16.mxu0 0
  %781 = vmatpush1.bf16.msra.mxu0 0
  %782 = vmatprep.mubr.bf16.mxu0 0
  %783 = vmatmul.mubr.bf16.gmra.mrb[0].mxu0 %v683
  %v784 = vpop.f32.mrb[0].mxu0
  %v785 = vadd.f32 0.0, %v784
  %v786 = vpop.f32.mrb[0].mxu0
  %v787 = vpop.f32.mrb[0].mxu0
  %v788 = vadd.f32 0.0, %v787
  %v789 = vpop.f32.mrb[0].mxu0
  %790 = vmatprep.mubr.bf16.mxu0 0
  %791 = vmatmul.mubr.bf16.gmra.mrb[0].mxu0 %v684
  %v792 = vpop.f32.mrb[0].mxu0
  %v793 = vadd.f32 0.0, %v792
  %v794 = vpop.f32.mrb[0].mxu0
  %v795 = vpop.f32.mrb[0].mxu0
  %v796 = vadd.f32 0.0, %v795
  %v797 = vpop.f32.mrb[0].mxu0
  %798 = vdwg.mxu0
  %v815 = vunpack.c.l.b16 %v667
  %v816 = vunpack.c.l.b16 %v668
  %v817 = vunpack.c.l.b16 %v669
  %v818 = vunpack.c.l.b16 %v670
  %v819 = vunpack.c.l.b16 %v671
  %v820 = vunpack.c.l.b16 %v672
  %v821 = vunpack.c.l.b16 %v673
  %v822 = vunpack.c.l.b16 %v674
  %v823 = vunpack.c.l.b16 %v675
  %v824 = vunpack.c.l.b16 %v676
  %v825 = vunpack.c.l.b16 %v677
  %v826 = vunpack.c.l.b16 %v678
  %v827 = vunpack.c.l.b16 %v679
  %v828 = vunpack.c.l.b16 %v680
  %v829 = vunpack.c.l.b16 %v681
  %v830 = vunpack.c.l.b16 %v682
  %v831 = vpack.c.b16 %v816, %v815
  %v832 = vpack.c.b16 %v818, %v817
  %v833 = vpack.c.b16 %v820, %v819
  %v834 = vpack.c.b16 %v822, %v821
  %v835 = vpack.c.b16 %v824, %v823
  %v836 = vpack.c.b16 %v826, %v825
  %v837 = vpack.c.b16 %v828, %v827
  %v838 = vpack.c.b16 %v830, %v829
  %847 = vmatprep.subr.bf16.mxu0 0
  %848 = vmatpush1.bf16.msra.mxu0 %v831
  %849 = vmatprep.subr.bf16.mxu0 0
  %850 = vmatpush1.bf16.msra.mxu0 %v832
  %851 = vmatprep.subr.bf16.mxu0 0
  %852 = vmatpush1.bf16.msra.mxu0 %v833
  %853 = vmatprep.subr.bf16.mxu0 0
  %854 = vmatpush1.bf16.msra.mxu0 %v834
  %855 = vmatprep.subr.bf16.mxu0 0
  %856 = vmatpush1.bf16.msra.mxu0 %v835
  %857 = vmatprep.subr.bf16.mxu0 0
  %858 = vmatpush1.bf16.msra.mxu0 %v836
  %859 = vmatprep.subr.bf16.mxu0 0
  %860 = vmatpush1.bf16.msra.mxu0 %v837
  %861 = vmatprep.subr.bf16.mxu0 0
  %862 = vmatpush1.bf16.msra.mxu0 %v838
  %863 = vmatprep.subr.bf16.mxu0 0
  %864 = vmatpush1.bf16.msra.mxu0 0
  %865 = vmatprep.subr.bf16.mxu0 0
  %866 = vmatpush1.bf16.msra.mxu0 0
  %867 = vmatprep.subr.bf16.mxu0 0
  %868 = vmatpush1.bf16.msra.mxu0 0
  %869 = vmatprep.subr.bf16.mxu0 0
  %870 = vmatpush1.bf16.msra.mxu0 0
  %871 = vmatprep.subr.bf16.mxu0 0
  %872 = vmatpush1.bf16.msra.mxu0 0
  %873 = vmatprep.subr.bf16.mxu0 0
  %874 = vmatpush1.bf16.msra.mxu0 0
  %875 = vmatprep.subr.bf16.mxu0 0
  %876 = vmatpush1.bf16.msra.mxu0 0
  %877 = vmatprep.subr.bf16.mxu0 0
  %878 = vmatpush1.bf16.msra.mxu0 0
  %879 = vmatprep.mubr.bf16.mxu0 0
  %880 = vmatmul.mubr.bf16.gmra.mrb[0].mxu0 %v665
  %v881 = vpop.f32.mrb[0].mxu0
  %v882 = vadd.f32 %v785, %v881
  %v883 = vpop.f32.mrb[0].mxu0
  %v884 = vpop.f32.mrb[0].mxu0
  %v885 = vadd.f32 %v788, %v884
  %v886 = vpop.f32.mrb[0].mxu0
  %887 = vmatprep.mubr.bf16.mxu0 0
  %888 = vmatmul.mubr.bf16.gmra.mrb[0].mxu0 %v666
  %v889 = vpop.f32.mrb[0].mxu0
  %v890 = vadd.f32 %v793, %v889
  %v891 = vpop.f32.mrb[0].mxu0
  %v892 = vpop.f32.mrb[0].mxu0
  %v893 = vadd.f32 %v796, %v892
  %v894 = vpop.f32.mrb[0].mxu0
  %895 = vdwg.mxu0
  %v896 = vpack.c.bf16 %v662, %v661
  %v897 = vpack.c.bf16 %v664, %v663
  %s898 = scalar_lea.vmem %s4, 128
  %v899 = vld [vmem:[%s898] sm:$0xf]
  %v900 = vld [vmem:[%s898 + $0x4] sm:$0xf]
  %v901 = vld [vmem:[%s898 + $0x8] sm:$0xf]
  %v902 = vld [vmem:[%s898 + $0xc] sm:$0xf]
  %v903 = vld [vmem:[%s898 + $0x10] sm:$0xf]
  %v904 = vld [vmem:[%s898 + $0x14] sm:$0xf]
  %v905 = vld [vmem:[%s898 + $0x18] sm:$0xf]
  %v906 = vld [vmem:[%s898 + $0x1c] sm:$0xf]
  %v907 = vld [vmem:[%s898 + $0x20] sm:$0xf]
  %v908 = vld [vmem:[%s898 + $0x24] sm:$0xf]
  %v909 = vld [vmem:[%s898 + $0x28] sm:$0xf]
  %v910 = vld [vmem:[%s898 + $0x2c] sm:$0xf]
  %v911 = vld [vmem:[%s898 + $0x30] sm:$0xf]
  %v912 = vld [vmem:[%s898 + $0x34] sm:$0xf]
  %v913 = vld [vmem:[%s898 + $0x38] sm:$0xf]
  %v914 = vld [vmem:[%s898 + $0x3c] sm:$0xf]
  %v931 = vunpack.c.l.b16 %v899
  %v932 = vunpack.c.l.b16 %v900
  %v933 = vunpack.c.l.b16 %v901
  %v934 = vunpack.c.l.b16 %v902
  %v935 = vunpack.c.l.b16 %v903
  %v936 = vunpack.c.l.b16 %v904
  %v937 = vunpack.c.l.b16 %v905
  %v938 = vunpack.c.l.b16 %v906
  %v939 = vunpack.c.l.b16 %v907
  %v940 = vunpack.c.l.b16 %v908
  %v941 = vunpack.c.l.b16 %v909
  %v942 = vunpack.c.l.b16 %v910
  %v943 = vunpack.c.l.b16 %v911
  %v944 = vunpack.c.l.b16 %v912
  %v945 = vunpack.c.l.b16 %v913
  %v946 = vunpack.c.l.b16 %v914
  %v947 = vpack.c.b16 %v932, %v931
  %v948 = vpack.c.b16 %v934, %v933
  %v949 = vpack.c.b16 %v936, %v935
  %v950 = vpack.c.b16 %v938, %v937
  %v951 = vpack.c.b16 %v940, %v939
  %v952 = vpack.c.b16 %v942, %v941
  %v953 = vpack.c.b16 %v944, %v943
  %v954 = vpack.c.b16 %v946, %v945
  %963 = vmatprep.subr.bf16.mxu0 0
  %964 = vmatpush1.bf16.msra.mxu0 %v947
  %965 = vmatprep.subr.bf16.mxu0 0
  %966 = vmatpush1.bf16.msra.mxu0 %v948
  %967 = vmatprep.subr.bf16.mxu0 0
  %968 = vmatpush1.bf16.msra.mxu0 %v949
  %969 = vmatprep.subr.bf16.mxu0 0
  %970 = vmatpush1.bf16.msra.mxu0 %v950
  %971 = vmatprep.subr.bf16.mxu0 0
  %972 = vmatpush1.bf16.msra.mxu0 %v951
  %973 = vmatprep.subr.bf16.mxu0 0
  %974 = vmatpush1.bf16.msra.mxu0 %v952
  %975 = vmatprep.subr.bf16.mxu0 0
  %976 = vmatpush1.bf16.msra.mxu0 %v953
  %977 = vmatprep.subr.bf16.mxu0 0
  %978 = vmatpush1.bf16.msra.mxu0 %v954
  %979 = vmatprep.subr.bf16.mxu0 0
  %980 = vmatpush1.bf16.msra.mxu0 0
  %981 = vmatprep.subr.bf16.mxu0 0
  %982 = vmatpush1.bf16.msra.mxu0 0
  %983 = vmatprep.subr.bf16.mxu0 0
  %984 = vmatpush1.bf16.msra.mxu0 0
  %985 = vmatprep.subr.bf16.mxu0 0
  %986 = vmatpush1.bf16.msra.mxu0 0
  %987 = vmatprep.subr.bf16.mxu0 0
  %988 = vmatpush1.bf16.msra.mxu0 0
  %989 = vmatprep.subr.bf16.mxu0 0
  %990 = vmatpush1.bf16.msra.mxu0 0
  %991 = vmatprep.subr.bf16.mxu0 0
  %992 = vmatpush1.bf16.msra.mxu0 0
  %993 = vmatprep.subr.bf16.mxu0 0
  %994 = vmatpush1.bf16.msra.mxu0 0
  %995 = vmatprep.mubr.bf16.mxu0 0
  %996 = vmatmul.mubr.bf16.gmra.mrb[0].mxu0 %v896
  %v997 = vpop.f32.mrb[0].mxu0
  %v998 = vadd.f32 0.0, %v997
  %v999 = vpop.f32.mrb[0].mxu0
  %v1000 = vpop.f32.mrb[0].mxu0
  %v1001 = vadd.f32 0.0, %v1000
  %v1002 = vpop.f32.mrb[0].mxu0
  %1003 = vmatprep.mubr.bf16.mxu0 0
  %1004 = vmatmul.mubr.bf16.gmra.mrb[0].mxu0 %v897
  %v1005 = vpop.f32.mrb[0].mxu0
  %v1006 = vadd.f32 0.0, %v1005
  %v1007 = vpop.f32.mrb[0].mxu0
  %v1008 = vpop.f32.mrb[0].mxu0
  %v1009 = vadd.f32 0.0, %v1008
  %v1010 = vpop.f32.mrb[0].mxu0
  %1011 = vdwg.mxu0
  %v1012 = vadd.f32 %v882, %v998
  %v1013 = vadd.f32 %v885, %v1001
  %v1014 = vadd.f32 %v890, %v1006
  %v1015 = vadd.f32 %v893, %v1009
  %v1016 = vadd.f32 %v1012, %v1013
  %v1017 = vadd.f32 %v1016, %v1014
  %v1018 = vadd.f32 %v1017, %v1015
  %v1019 = vrot.slane %v1018, 4
  %v1020 = vadd.f32 %v1018, %v1019
  %v1021 = vrot.slane %v1020, 2
  %v1022 = vadd.f32 %v1020, %v1021
  %v1023 = vrot.slane %v1022, 1
  %v1024 = vadd.f32 %v1022, %v1023
  %v1025 = vmul.f32 %v1012, %v1012
  %v1026 = vmul.f32 %v1013, %v1013
  %v1027 = vmul.f32 %v1014, %v1014
  %v1028 = vmul.f32 %v1015, %v1015
  %v1029 = vadd.f32 %v1025, %v1026
  %v1030 = vadd.f32 %v1029, %v1027
  %v1031 = vadd.f32 %v1030, %v1028
  %v1032 = vrot.slane %v1031, 4
  %v1033 = vadd.f32 %v1031, %v1032
  %v1034 = vrot.slane %v1033, 2
  %v1035 = vadd.f32 %v1033, %v1034
  %v1036 = vrot.slane %v1035, 1
  %v1037 = vadd.f32 %v1035, %v1036
  %v1038 = vsel %vm494, %v1024, %v1037
  %1039 = vmatprep.subr.mxu0 0.0
  %1040 = vmatpush1.msra.mxu0 %v496
  %1041 = vmatprep.subr.mxu0 0.0
  %1042 = vmatpush1.msra.mxu0 %v497
  %1043 = vmatprep.subr.mxu0 0.0
  %1044 = vmatpush1.msra.mxu0 %v498
  %1045 = vmatprep.subr.mxu0 0.0
  %1046 = vmatpush1.msra.mxu0 %v499
  %1047 = vmatprep.subr.mxu0 0.0
  %1048 = vmatpush1.msra.mxu0 %v500
  %1049 = vmatprep.subr.mxu0 0.0
  %1050 = vmatpush1.msra.mxu0 %v501
  %1051 = vmatprep.subr.mxu0 0.0
  %1052 = vmatpush1.msra.mxu0 %v502
  %1053 = vmatprep.subr.mxu0 0.0
  %1054 = vmatpush1.msra.mxu0 %v503
  %1055 = vmatprep.subr.mxu0 0.0
  %1056 = vmatpush1.msra.mxu0 %v504
  %1057 = vmatprep.subr.mxu0 0.0
  %1058 = vmatpush1.msra.mxu0 %v505
  %1059 = vmatprep.subr.mxu0 0.0
  %1060 = vmatpush1.msra.mxu0 %v506
  %1061 = vmatprep.subr.mxu0 0.0
  %1062 = vmatpush1.msra.mxu0 %v507
  %1063 = vmatprep.subr.mxu0 0.0
  %1064 = vmatpush1.msra.mxu0 %v508
  %1065 = vmatprep.subr.mxu0 0.0
  %1066 = vmatpush1.msra.mxu0 %v509
  %1067 = vmatprep.subr.mxu0 0.0
  %1068 = vmatpush1.msra.mxu0 %v510
  %1069 = vmatprep.subr.mxu0 0.0
  %1070 = vmatpush1.msra.mxu0 %v511
  %1071 = vmatprep.subr.mxu0 0.0
  %1072 = vmatpush1.msra.mxu0 0.0
  %1073 = vmatprep.subr.mxu0 0.0
  %1074 = vmatpush1.msra.mxu0 0.0
  %1075 = vmatprep.subr.mxu0 0.0
  %1076 = vmatpush1.msra.mxu0 0.0
  %1077 = vmatprep.subr.mxu0 0.0
  %1078 = vmatpush1.msra.mxu0 0.0
  %1079 = vmatprep.subr.mxu0 0.0
  %1080 = vmatpush1.msra.mxu0 0.0
  %1081 = vmatprep.subr.mxu0 0.0
  %1082 = vmatpush1.msra.mxu0 0.0
  %1083 = vmatprep.subr.mxu0 0.0
  %1084 = vmatpush1.msra.mxu0 0.0
  %1085 = vmatprep.subr.mxu0 0.0
  %1086 = vmatpush1.msra.mxu0 0.0
  %1087 = vmatprep.subr.mxu0 0.0
  %1088 = vmatpush1.msra.mxu0 0.0
  %1089 = vmatprep.subr.mxu0 0.0
  %1090 = vmatpush1.msra.mxu0 0.0
  %1091 = vmatprep.subr.mxu0 0.0
  %1092 = vmatpush1.msra.mxu0 0.0
  %1093 = vmatprep.subr.mxu0 0.0
  %1094 = vmatpush1.msra.mxu0 0.0
  %1095 = vmatprep.subr.mxu0 0.0
  %1096 = vmatpush1.msra.mxu0 0.0
  %1097 = vmatprep.subr.mxu0 0.0
  %1098 = vmatpush1.msra.mxu0 0.0
  %1099 = vmatprep.subr.mxu0 0.0
  %1100 = vmatpush1.msra.mxu0 0.0
  %1101 = vmatprep.subr.mxu0 0.0
  %1102 = vmatpush1.msra.mxu0 0.0
  %1103 = vmatprep.mubr.f32.mxu0 0.0
  %1104 = vmatmul.mubr.f32.gmra.mrb[0].mxu0 %v1038
  %v1105 = vpop.f32.mrb[0].mxu0
  %v1106 = vadd.f32 0.0, %v1105
  %v1107 = vpop.f32.mrb[0].mxu0
  %1108 = vdwg.mxu0
  %v1109 = vmul.f32 %v1106, %v1106
  %v1111 = vrot.slane %v1109, 7
  %v1113 = vsub.f32 %v1106, %v1111
  %v1114 = vld [vmem:[%s5] sm:$0x1]
  %v1115 = vadd.f32 %v1113, 1e-05
  %v1116 = vrsqrt.pop %v1115
  %v1119 = vunpack.c.l.s4 1966171168
  %v1120 = vunpack.c.0.s8 %v1119
  %v1121 = vlaneseq
  %v1122 = vshrl.u32 %v1121, 7
  %v1123 = vsub.s32 %v1120, %v1122
  %v1124 = vrot.slane %v1116, %v1123
  %v1125 = vcombine.high %v1124, %v1124
  %v1127 = vunpack.c.l.s4 1966171168
  %v1128 = vunpack.c.0.s8 %v1127
  %v1129 = vlaneseq
  %v1130 = vshrl.u32 %v1129, 7
  %v1131 = vsub.s32 %v1128, %v1130
  %v1132 = vrot.slane %v1125, %v1131
  %v1134 = vmul.f32 %v1114, %v1132
  %v1135 = vlaneseq
  %v1136 = vshrl.u32 %v1135, 7
  %v1137 = vsub.s32 0, %v1136
  %v1138 = vrot.slane %v1106, %v1137
  %v1139 = vsub.f32 %v1012, %v1138
  %v1140 = vsub.f32 %v1013, %v1138
  %v1141 = vsub.f32 %v1014, %v1138
  %v1142 = vsub.f32 %v1015, %v1138
  %v1144 = vlaneseq
  %v1145 = vshrl.u32 %v1144, 7
  %v1146 = vsub.s32 0, %v1145
  %v1147 = vrot.slane %v1134, %v1146
  %v1149 = vmul.f32 %v1139, %v1147
  %v1150 = vmul.f32 %v1140, %v1147
  %v1151 = vmul.f32 %v1141, %v1147
  %v1152 = vmul.f32 %v1142, %v1147
  %v1153 = vld [vmem:[%s6] sm:$0x1]
  %v1155 = vlaneseq
  %v1156 = vshrl.u32 %v1155, 7
  %v1157 = vsub.s32 0, %v1156
  %v1158 = vrot.slane %v1153, %v1157
  %v1160 = vadd.f32 %v1149, %v1158
  %v1161 = vadd.f32 %v1150, %v1158
  %v1162 = vadd.f32 %v1151, %v1158
  %v1163 = vadd.f32 %v1152, %v1158
  %v1164 = vadd.f32 %v1160, %v91
  %v1165 = vadd.f32 %v1161, %v92
  %v1166 = vadd.f32 %v1162, %v93
  %v1167 = vadd.f32 %v1163, %v94
  %v1168 = vmax.f32 %v1164, 0.0
  %v1169 = vmax.f32 %v1165, 0.0
  %v1170 = vmax.f32 %v1166, 0.0
  %v1171 = vmax.f32 %v1167, 0.0
  %1172 = vst [vmem:[%s8] sm:$0xff] %v1168
  %1173 = vst [vmem:[%s8 + $0x8] sm:$0xff] %v1169
  %1174 = vst [vmem:[%s8 + $0x10] sm:$0xff] %v1170
  %1175 = vst [vmem:[%s8 + $0x18] sm:$0xff] %v1171
  // Predicated region
  $region34: #{basic_block_forward.1} parent=0 // pred_check
    _
  $region35: #{basic_block_forward.1} parent=0 // pred_check_branch
    %1177 = sbr.rel (0) target = $region37
  $region36: #{basic_block_forward.1} parent=0 // pred_region
    _
  $region37: #{basic_block_forward.1} parent=0 // pred_fallthru
    _
  // Predicated region
  $region38: #{basic_block_forward.1} parent=0 // pred_check
    _
  $region39: #{basic_block_forward.1} parent=0 // pred_check_branch
    %1179 = sbr.rel (0) target = $region41
  $region40: #{basic_block_forward.1} parent=0 // pred_region
    _
  $region41: #{basic_block_forward.1} parent=0 // pred_fallthru
    _

</llo_original>
